<compile_context>
chip_gen: v6e
topology: v6e:2x2x1
jax: 0.10.0
libtpu: 0.0.40
codegen_flags: <defaults>
</compile_context>

<pallas_src>
import jax
import jax.numpy as jnp
from jax.experimental import pallas as pl
from jax.experimental.pallas import tpu as pltpu


def scaler_kernel(x_ref, a_ref, b_ref, o_ref):
    """(rows, dim) block: o = (x - a) / b, a/b broadcast over rows."""
    x = x_ref[...]            # (rows, dim)
    a = a_ref[...]            # (1, dim)  -> broadcasts over rows
    b = b_ref[...]            # (1, dim)
    o_ref[...] = ((x - a) / b).astype(o_ref.dtype)


def scaler_forward(x, a, b, *, block_rows=None):
    """x: (B, D); a, b: (D,) or (1, D). Returns (x - a) / b."""
    B, D = x.shape
    a2 = a.reshape(1, D).astype(x.dtype)
    b2 = b.reshape(1, D).astype(x.dtype)

    # Single grid step when everything fits (the common / demo case); otherwise
    # tile rows.  Row blocks must either be the full extent or a multiple of 8.
    if block_rows is None or block_rows >= B:
        block_rows = B
    else:
        assert B % block_rows == 0 and block_rows % 8 == 0, (
            "block_rows must divide B and be a multiple of 8")

    grid = (B // block_rows,)

    return pl.pallas_call(
        scaler_kernel,
        out_shape=jax.ShapeDtypeStruct((B, D), x.dtype),
        grid_spec=pl.GridSpec(
            grid=grid,
            in_specs=[
                pl.BlockSpec((block_rows, D), lambda i: (i, 0)),   # x
                pl.BlockSpec((1, D),          lambda i: (0, 0)),   # a
                pl.BlockSpec((1, D),          lambda i: (0, 0)),   # b
            ],
            out_specs=pl.BlockSpec((block_rows, D), lambda i: (i, 0)),
        ),
        compiler_params=pltpu.CompilerParams(
            dimension_semantics=("parallel",)),
    )(x, a2, b2)


def scaler_reference(x, a, b):
    """Pure-JAX reference mirroring the PyTorch forward."""
    return (x - a.reshape(1, -1)) / b.reshape(1, -1)


if __name__ == "__main__":
    # Small shapes consistent with the module: batch of 8 samples, dim=128.
    B, D = 8, 128

    key = jax.random.PRNGKey(0)
    kx, ka, kb = jax.random.split(key, 3)

    x = jax.random.normal(kx, (B, D), dtype=jnp.float32)
    # Buffers as a fitted scaler would hold them: arbitrary mean, positive std.
    a = jax.random.normal(ka, (D,), dtype=jnp.float32)
    b = jnp.abs(jax.random.normal(kb, (D,), dtype=jnp.float32)) + 0.5

    out = scaler_forward(x, a, b)
    out = jax.block_until_ready(out)

    ref = scaler_reference(x, a, b)
    assert out.shape == (B, D)
    assert jnp.allclose(out, ref, atol=1e-6, rtol=1e-6), "mismatch vs reference"

    print("KERNEL_OK")
</pallas_src>

<mosaic_0001>
module attributes {stable_mosaic.version = 11 : i64} {
  func.func @scaler_kernel(%arg0: i32, %arg1: memref<8x128xf32, #tpu.memory_space<vmem>>, %arg2: memref<1x128xf32, #tpu.memory_space<vmem>>, %arg3: memref<1x128xf32, #tpu.memory_space<vmem>>, %arg4: memref<8x128xf32, #tpu.memory_space<vmem>>) attributes {dimension_semantics = [#tpu.dimension_semantics<parallel>], iteration_bounds = array<i64: 1>, scalar_prefetch = 0 : i64, scratch_operands = 0 : i64, tpu.core_type = #tpu.core_type<tc>, window_params = [{transform_indices = @transform_0, window_bounds = array<i64: 8, 128>}, {pipeline_mode = #tpu.pipeline_mode<synchronous>, transform_indices = @transform_1, window_bounds = array<i64: 1, 128>}, {pipeline_mode = #tpu.pipeline_mode<synchronous>, transform_indices = @transform_2, window_bounds = array<i64: 1, 128>}, {transform_indices = @transform_3, window_bounds = array<i64: 8, 128>}]} {
    %c0 = arith.constant 0 : index
    %c0_0 = arith.constant 0 : index
    %0 = vector.load %arg1[%c0, %c0_0] : memref<8x128xf32, #tpu.memory_space<vmem>>, vector<8x128xf32>
    %c0_1 = arith.constant 0 : index
    %c0_2 = arith.constant 0 : index
    %1 = vector.load %arg2[%c0_1, %c0_2] : memref<1x128xf32, #tpu.memory_space<vmem>>, vector<1x128xf32>
    %c0_3 = arith.constant 0 : index
    %c0_4 = arith.constant 0 : index
    %2 = vector.load %arg3[%c0_3, %c0_4] : memref<1x128xf32, #tpu.memory_space<vmem>>, vector<1x128xf32>
    %3 = vector.broadcast %1 : vector<1x128xf32> to vector<8x128xf32>
    %4 = arith.subf %0, %3 : vector<8x128xf32>
    %5 = vector.broadcast %2 : vector<1x128xf32> to vector<8x128xf32>
    %6 = arith.divf %4, %5 : vector<8x128xf32>
    %c0_5 = arith.constant 0 : index
    %c0_6 = arith.constant 0 : index
    %7 = vector.load %arg4[%c0_5, %c0_6] : memref<8x128xf32, #tpu.memory_space<vmem>>, vector<8x128xf32>
    tpu.vector_store %arg4[%c0_5, %c0_6], %6 {strides = array<i32>} : memref<8x128xf32, #tpu.memory_space<vmem>>, vector<8x128xf32>,
    return
  }
  func.func @transform_0(%arg0: i32) -> (i32, i32) {
    %c0_i32 = arith.constant 0 : i32
    %c0_i32_0 = arith.constant 0 : i32
    return %arg0, %c0_i32 : i32, i32
  }
  func.func @transform_1(%arg0: i32) -> (i32, i32) {
    %c0_i32 = arith.constant 0 : i32
    %c0_i32_0 = arith.constant 0 : i32
    %c0_i32_1 = arith.constant 0 : i32
    return %c0_i32, %c0_i32_0 : i32, i32
  }
  func.func @transform_2(%arg0: i32) -> (i32, i32) {
    %c0_i32 = arith.constant 0 : i32
    %c0_i32_0 = arith.constant 0 : i32
    %c0_i32_1 = arith.constant 0 : i32
    return %c0_i32, %c0_i32_0 : i32, i32
  }
  func.func @transform_3(%arg0: i32) -> (i32, i32) {
    %c0_i32 = arith.constant 0 : i32
    %c0_i32_0 = arith.constant 0 : i32
    return %arg0, %c0_i32 : i32, i32
  }
}

</mosaic_0001>

<llo_original>
// kernel: tpu_custom_call.1
$region0: #{tpu_custom_call.1}
  #allocation0 [shape = 'u32[]', space=smem, size = 0x4, offset = 0x4, fixed_abs, tag = 'smem constant byte address 0x4 - core index']
  #allocation1 [shape = 'u32[144,128]{1,0:T(1,128)}', space=vmem, size = 0x12000, scoped, tag = 'internal scratch']
  %s0 = inlined_call_operand.hbm [shape: f32[8,128], index: 0, kind: input, shape index: {}]
  %s1 = inlined_call_operand.vmem [shape: f32[1,128], index: 1, kind: input, shape index: {}]
  %s2 = inlined_call_operand.vmem [shape: f32[1,128], index: 2, kind: input, shape index: {}]
  %s3 = inlined_call_operand.hbm [shape: f32[8,128], index: 3, kind: output, shape index: {}]
  %s4 = sld [smem:[#allocation0]]
  $region26: #{tpu_custom_call.1} parent=0
    _
  %s6 = ssub.s32 1, %s4
  %s7 = scalar_select 0, %s6, %s4
  $region1: #{tpu_custom_call.1} parent=0
    #allocation2 [shape = 'u8[4096]{0}', space=vmem, size = 0x1000, scoped, tag = 'input window, operand 0, single buffered']
    #allocation3 [shape = 's32[1]{0}', space=sflag, size = 0x4, scoped, tag = 'scoped memory for tpu_custom_call.1']
    #allocation4 [shape = 's32[1]{0}', space=sflag, size = 0x4, scoped, tag = 'scoped memory for tpu_custom_call.1']
    #allocation5 [shape = 'u8[4096]{0}', space=vmem, size = 0x1000, scoped, tag = 'output window, operand 0, single buffered']
    %8 = vsyncpa [#allocation3], 0
    %9 = vsyncpa [#allocation4], 0
    // Predicated region
    $region2: #{tpu_custom_call.1} parent=1 // pred_check
      _
    $region3: #{tpu_custom_call.1} parent=1 // pred_check_branch
      %11 = sbr.rel (0) target = $region5
    $region4: #{tpu_custom_call.1} parent=1 // pred_region
      %s13 = ssub.s32 128, 128
      %14 = vsyncadd [#allocation3], %s13
      %s16 = sshll.u32 [#allocation2], 4
      %s17 = int_to_ptr.vmem [resolvable:$true] %s16
      %19 = dma.hbm_to_vmem [thread:$0]  %s0, 128, %s17, [#allocation3]
    $region5: #{tpu_custom_call.1} parent=1 // pred_fallthru
      _
    // Predicated region
    $region6: #{tpu_custom_call.1} parent=1 // pred_check
      _
    $region7: #{tpu_custom_call.1} parent=1 // pred_check_branch
      %21 = sbr.rel (0) target = $region9
    $region8: #{tpu_custom_call.1} parent=1 // pred_region
      _
    $region9: #{tpu_custom_call.1} parent=1 // pred_fallthru
      _
    // Predicated region
    $region10: #{tpu_custom_call.1} parent=1 // pred_check
      _
    $region11: #{tpu_custom_call.1} parent=1 // pred_check_branch
      %23 = sbr.rel (0) target = $region13
    $region12: #{tpu_custom_call.1} parent=1 // pred_region
      _
    $region13: #{tpu_custom_call.1} parent=1 // pred_fallthru
      _
    // Predicated region
    $region14: #{tpu_custom_call.1} parent=1 // pred_check
      _
    $region15: #{tpu_custom_call.1} parent=1 // pred_check_branch
      %25 = sbr.rel (0) target = $region17
    $region16: #{tpu_custom_call.1} parent=1 // pred_region
      %26 = dma.done [#allocation3], 128
    $region17: #{tpu_custom_call.1} parent=1 // pred_fallthru
      _
    %v27 = vld [vmem:[#allocation2] sm:$0xff]
    %v28 = vld [vmem:[%s1] sm:$0x1]
    %v29 = vld [vmem:[%s2] sm:$0x1]
    %v31 = vlaneseq
    %v32 = vshrl.u32 %v31, 7
    %v33 = vsub.s32 0, %v32
    %v34 = vrot.slane %v28, %v33
    %v36 = vsub.f32 %v27, %v34
    %v38 = vlaneseq
    %v39 = vshrl.u32 %v38, 7
    %v40 = vsub.s32 0, %v39
    %v41 = vrot.slane %v29, %v40
    %v43 = vrcp.pop %v41
    %v44 = vmul.f32 %v36, %v43
    %45 = vst [vmem:[#allocation5] sm:$0xff] %v44
    // Predicated region
    $region18: #{tpu_custom_call.1} parent=1 // pred_check
      _
    $region19: #{tpu_custom_call.1} parent=1 // pred_check_branch
      %47 = sbr.rel (0) target = $region21
    $region20: #{tpu_custom_call.1} parent=1 // pred_region
      %s49 = ssub.s32 128, 128
      %50 = vsyncadd [#allocation4], %s49
      %s52 = sshll.u32 [#allocation5], 4
      %s53 = int_to_ptr.vmem [resolvable:$true] %s52
      %55 = dma.vmem_to_hbm [thread:$0]  %s53, 128, %s3, [#allocation4]
    $region21: #{tpu_custom_call.1} parent=1 // pred_fallthru
      _
    // Predicated region
    $region22: #{tpu_custom_call.1} parent=1 // pred_check
      _
    $region23: #{tpu_custom_call.1} parent=1 // pred_check_branch
      %57 = sbr.rel (0) target = $region25
    $region24: #{tpu_custom_call.1} parent=1 // pred_region
      %58 = dma.done [#allocation4], 128
    $region25: #{tpu_custom_call.1} parent=1 // pred_fallthru
      _
    %59 = vsyncpa [#allocation3], 1
    %60 = vsyncpa [#allocation4], 1

</llo_original>
